<compile_context>
chip_gen: v5e
topology: v5e:2x2
jax: 0.10.0
libtpu: 0.0.40
codegen_flags: <defaults>
</compile_context>

<pallas_src>
import jax
import jax.numpy as jnp
from jax.experimental import pallas as pl
from jax.experimental.pallas import tpu as pltpu

_LANE = 128  # TPU vreg lane width; batch tiles are multiples of this.


def _round_up8(n):
    return ((int(n) + 7) // 8) * 8


def ncf_fused_kernel(uid_ref, iid_ref, urows_ref, irows_ref,
                     w1u_ref, w1i_ref, bias_ref, w2_ref, w3_ref, o_ref):
    """Fused NCF forward for one batch tile, batch on the lane axis.

    uid_ref / iid_ref : (1, tb)       int32   user / item indices for this tile
    urows_ref         : (NU, tb)      int32   row ids 0..NU-1 (resident, precomputed)
    irows_ref         : (NI, tb)      int32   row ids 0..NI-1 (resident, precomputed)
    w1u_ref           : (2E, NU)      cdt     W1[:, :E] @ user_emb.T
    w1i_ref           : (2E, NI)      cdt     W1[:, E:] @ item_emb.T
    bias_ref          : (rows, 1)     f32     packed [b1 | b2 | b3], 8-row aligned
    w2_ref            : (E, 2E)       cdt     PyTorch (out, in) layout
    w3_ref            : (1, E)        cdt
    o_ref             : (1, tb)       f32     lane-dense output block
    """
    cdt = w1u_ref.dtype
    nu = urows_ref.shape[0]
    ni = irows_ref.shape[0]
    e = w2_ref.shape[0]
    two_e = w2_ref.shape[1]

    off_b2 = _round_up8(two_e)
    off_b3 = off_b2 + _round_up8(e)
    b1 = bias_ref[0:two_e, :]                 # (2E, 1)
    b2 = bias_ref[off_b2:off_b2 + e, :]       # (E, 1)
    b3 = bias_ref[off_b3:off_b3 + 1, :]       # (1, 1)

    # Clamp indices: ragged-tail block contents are undefined; clamping keeps the
    # selection bounded/deterministic (tail lanes are discarded on store anyway).
    uid = jnp.clip(uid_ref[...], 0, nu - 1)   # (1, tb) int32
    iid = jnp.clip(iid_ref[...], 0, ni - 1)   # (1, tb) int32

    # One-hot selection columns from the resident row-id planes (no per-step iota).
    u_oh = (urows_ref[...] == uid).astype(cdt)    # (NU, tb)
    i_oh = (irows_ref[...] == iid).astype(cdt)    # (NI, tb)

    # Layer 1 folded into the gather:  h1^T = W1u @ u_oh + W1i @ i_oh + b1
    h1 = (jnp.dot(w1u_ref[...], u_oh, preferred_element_type=jnp.float32)
          + jnp.dot(w1i_ref[...], i_oh, preferred_element_type=jnp.float32)
          + b1)
    h1 = jnp.maximum(h1, 0.0).astype(cdt)         # (2E, tb)

    h2 = jnp.dot(w2_ref[...], h1, preferred_element_type=jnp.float32) + b2
    h2 = jnp.maximum(h2, 0.0).astype(cdt)         # (E, tb)

    o_ref[...] = (jnp.dot(w3_ref[...], h2, preferred_element_type=jnp.float32)
                  + b3)                           # (1, tb), f32


def ncf_forward(user_idx, item_idx, params, *, block_b=4096,
                compute_dtype=jnp.float32):
    """Full NCF forward: gather + concat + MLP fused inside one Pallas kernel."""
    B = int(user_idx.shape[0])
    num_users, emb_dim = params["user_emb"].shape
    num_items, _ = params["item_emb"].shape
    two_e = 2 * emb_dim

    # ---- Batch tile: multiple of 128, big enough to amortize per-step overhead,
    # but capped so the grid keeps >= 2 tiles when the batch allows it (v7x: 2 TCs).
    b_ceil = pl.cdiv(B, _LANE) * _LANE
    tb = max(_LANE, (int(block_b) // _LANE) * _LANE)
    tb = min(tb, b_ceil)
    if b_ceil >= 2 * _LANE:
        half = pl.cdiv(pl.cdiv(B, 2), _LANE) * _LANE
        tb = min(tb, max(half, _LANE))
    grid = (pl.cdiv(B, tb),)

    # ---- Indices: no padding, no copies; Pallas handles the ragged tail block.
    uid = user_idx.astype(jnp.int32).reshape(1, B)
    iid = item_idx.astype(jnp.int32).reshape(1, B)

    # ---- Fold W1 into the gather (one-time host-side GEMMs on tiny tables).
    w1 = params["w1"].astype(jnp.float32)
    w1u = (w1[:, :emb_dim] @ params["user_emb"].astype(jnp.float32).T).astype(compute_dtype)
    w1i = (w1[:, emb_dim:] @ params["item_emb"].astype(jnp.float32).T).astype(compute_dtype)
    w2 = params["w2"].astype(compute_dtype)                 # (E, 2E)
    w3 = params["w3"].astype(compute_dtype)                 # (1, E)

    # ---- Pack biases into one f32 slab (8-row aligned segments).
    off_b2 = _round_up8(two_e)
    off_b3 = off_b2 + _round_up8(emb_dim)
    bias_rows = off_b3 + _round_up8(1)
    bias_pack = jnp.zeros((bias_rows, 1), jnp.float32)
    bias_pack = bias_pack.at[0:two_e, :].set(
        params["b1"].reshape(two_e, 1).astype(jnp.float32))
    bias_pack = bias_pack.at[off_b2:off_b2 + emb_dim, :].set(
        params["b2"].reshape(emb_dim, 1).astype(jnp.float32))
    bias_pack = bias_pack.at[off_b3:off_b3 + 1, :].set(
        params["b3"].reshape(1, 1).astype(jnp.float32))

    # ---- Precomputed row-id planes: removes the per-step broadcasted_iota.
    urows = jax.lax.broadcasted_iota(jnp.int32, (num_users, tb), 0)
    irows = jax.lax.broadcasted_iota(jnp.int32, (num_items, tb), 0)

    idx_spec = pl.BlockSpec((1, tb), lambda i: (0, i))

    def resident(shape):
        return pl.BlockSpec(shape, lambda i: (0, 0))

    in_specs = [
        idx_spec, idx_spec,
        resident(urows.shape), resident(irows.shape),
        resident(w1u.shape), resident(w1i.shape),
        resident(bias_pack.shape),
        resident(w2.shape), resident(w3.shape),
    ]

    # ---- Advisory cost estimate (gather-GEMMs + 2 remaining layers).
    steps = int(grid[0])
    flops = 2 * steps * tb * (two_e * num_users + two_e * num_items
                              + emb_dim * two_e + emb_dim)
    param_bytes = sum(int(a.size) * a.dtype.itemsize
                      for a in (w1u, w1i, w2, w3, bias_pack))
    bytes_accessed = (param_bytes + (num_users + num_items) * tb * 4
                      + 2 * B * 4 + B * 4)
    cost = pl.CostEstimate(flops=int(flops), transcendentals=0,
                           bytes_accessed=int(bytes_accessed))

    # ---- Explicit VMEM limit only when a very large tile needs it.
    cdt_bytes = jnp.dtype(compute_dtype).itemsize
    est_vmem = int(
        3 * (num_users + num_items) * tb * 4          # row-id planes + one-hots
        + 6 * two_e * tb * max(4, cdt_bytes)          # activations / temporaries
        + 16 * tb * 4                                 # index & output blocks
        + 4 * param_bytes)
    cp_kwargs = dict(dimension_semantics=("parallel",))
    if est_vmem > 24 * (1 << 20):
        # TODO(synk): on v7x (64 MiB VMEM/TC) prefer lowering block_b instead.
        cp_kwargs["vmem_limit_bytes"] = int(min(max(est_vmem, 32 << 20), 60 << 20))

    out = pl.pallas_call(
        ncf_fused_kernel,
        out_shape=jax.ShapeDtypeStruct((1, B), jnp.float32),
        grid_spec=pltpu.PrefetchScalarGridSpec(
            num_scalar_prefetch=0,
            grid=grid,
            in_specs=in_specs,
            out_specs=pl.BlockSpec((1, tb), lambda i: (0, i)),
        ),
        compiler_params=pltpu.CompilerParams(**cp_kwargs),
        cost_estimate=cost,
    )(uid, iid, urows, irows, w1u, w1i, bias_pack, w2, w3)

    # Match torch .squeeze(): (B,) for B > 1, scalar for B == 1.  out[0] is a
    # view-style reshape of the unpadded (1, B) result (no padded-slice copy).
    return out[0].squeeze()


def init_params(key, num_users, num_items, emb_dim=8):
    """Deterministic synthetic parameters in PyTorch-style (out, in) layouts."""
    ks = jax.random.split(key, 8)
    two_e = 2 * emb_dim
    return {
        "user_emb": jax.random.normal(ks[0], (num_users, emb_dim), jnp.float32),
        "item_emb": jax.random.normal(ks[1], (num_items, emb_dim), jnp.float32),
        "w1": jax.random.normal(ks[2], (two_e, two_e), jnp.float32) * 0.1,    # (out, in)
        "b1": jax.random.normal(ks[3], (two_e, 1), jnp.float32) * 0.1,
        "w2": jax.random.normal(ks[4], (emb_dim, two_e), jnp.float32) * 0.1,  # (out, in)
        "b2": jax.random.normal(ks[5], (emb_dim, 1), jnp.float32) * 0.1,
        "w3": jax.random.normal(ks[6], (1, emb_dim), jnp.float32) * 0.1,      # (out, in)
        "b3": jax.random.normal(ks[7], (1, 1), jnp.float32) * 0.1,
    }


def ncf_reference(user_idx, item_idx, params):
    """Pure-JAX f32 reference mirroring the PyTorch forward."""
    u = jnp.take(params["user_emb"], user_idx, axis=0)
    v = jnp.take(params["item_emb"], item_idx, axis=0)
    x = jnp.concatenate([u, v], axis=1)
    h1 = jnp.maximum(x @ params["w1"].T + params["b1"].T, 0.0)
    h2 = jnp.maximum(h1 @ params["w2"].T + params["b2"].T, 0.0)
    return (h2 @ params["w3"].T + params["b3"].T).squeeze()


if __name__ == "__main__":
    num_users, num_items, emb_dim = 32, 48, 8
    batch = 200  # deliberately not a multiple of 128: exercises the ragged tail

    params = init_params(jax.random.PRNGKey(0), num_users, num_items, emb_dim)
    k_u, k_i = jax.random.split(jax.random.PRNGKey(0), 2)
    user_idx = jax.random.randint(k_u, (batch,), 0, num_users, dtype=jnp.int32)
    item_idx = jax.random.randint(k_i, (batch,), 0, num_items, dtype=jnp.int32)

    ref = ncf_reference(user_idx, item_idx, params)

    # f32 path (default): tight check against the pure-JAX reference.
    out_f32 = jax.block_until_ready(
        ncf_forward(user_idx, item_idx, params, compute_dtype=jnp.float32))
    assert out_f32.shape == (batch,), f"unexpected output shape {out_f32.shape}"
    assert jnp.allclose(out_f32, ref, atol=1e-4, rtol=1e-4), "f32 kernel mismatch"

    # bf16 weights/activations (f32 accumulate): loose tolerance vs. f32 reference.
    out_bf16 = jax.block_until_ready(
        ncf_forward(user_idx, item_idx, params, compute_dtype=jnp.bfloat16))
    assert out_bf16.shape == (batch,), f"unexpected output shape {out_bf16.shape}"
    assert jnp.allclose(out_bf16, ref, atol=3e-2, rtol=3e-2), "bf16 kernel mismatch"

    print("KERNEL_OK")
</pallas_src>

<mosaic_0001>
module attributes {stable_mosaic.version = 11 : i64} {
  func.func @ncf_fused_kernel(%arg0: i32, %arg1: memref<1x128xi32, #tpu.memory_space<vmem>>, %arg2: memref<1x128xi32, #tpu.memory_space<vmem>>, %arg3: memref<32x128xi32, #tpu.memory_space<vmem>>, %arg4: memref<48x128xi32, #tpu.memory_space<vmem>>, %arg5: memref<16x32xf32, #tpu.memory_space<vmem>>, %arg6: memref<16x48xf32, #tpu.memory_space<vmem>>, %arg7: memref<32x1xf32, #tpu.memory_space<vmem>>, %arg8: memref<8x16xf32, #tpu.memory_space<vmem>>, %arg9: memref<1x8xf32, #tpu.memory_space<vmem>>, %arg10: memref<1x128xf32, #tpu.memory_space<vmem>>) attributes {dimension_semantics = [#tpu.dimension_semantics<parallel>], iteration_bounds = array<i64: 2>, scalar_prefetch = 0 : i64, scratch_operands = 0 : i64, tpu.core_type = #tpu.core_type<tc>, window_params = [{transform_indices = @transform_0, window_bounds = array<i64: 1, 128>}, {transform_indices = @transform_1, window_bounds = array<i64: 1, 128>}, {pipeline_mode = #tpu.pipeline_mode<synchronous>, transform_indices = @transform_2, window_bounds = array<i64: 32, 128>}, {pipeline_mode = #tpu.pipeline_mode<synchronous>, transform_indices = @transform_3, window_bounds = array<i64: 48, 128>}, {pipeline_mode = #tpu.pipeline_mode<synchronous>, transform_indices = @transform_4, window_bounds = array<i64: 16, 32>}, {pipeline_mode = #tpu.pipeline_mode<synchronous>, transform_indices = @transform_5, window_bounds = array<i64: 16, 48>}, {pipeline_mode = #tpu.pipeline_mode<synchronous>, transform_indices = @transform_6, window_bounds = array<i64: 32, 1>}, {pipeline_mode = #tpu.pipeline_mode<synchronous>, transform_indices = @transform_7, window_bounds = array<i64: 8, 16>}, {pipeline_mode = #tpu.pipeline_mode<synchronous>, transform_indices = @transform_8, window_bounds = array<i64: 1, 8>}, {transform_indices = @transform_9, window_bounds = array<i64: 1, 128>}]} {
    %c0 = arith.constant 0 : index
    %c0_0 = arith.constant 0 : index
    %0 = vector.load %arg7[%c0, %c0_0] : memref<32x1xf32, #tpu.memory_space<vmem>>, vector<16x1xf32>
    %c16 = arith.constant 16 : index
    %c0_1 = arith.constant 0 : index
    %1 = vector.load %arg7[%c16, %c0_1] : memref<32x1xf32, #tpu.memory_space<vmem>>, vector<8x1xf32>
    %c24 = arith.constant 24 : index
    %c0_2 = arith.constant 0 : index
    %2 = vector.load %arg7[%c24, %c0_2] : memref<32x1xf32, #tpu.memory_space<vmem>>, vector<1x1xf32>
    %c0_3 = arith.constant 0 : index
    %c0_4 = arith.constant 0 : index
    %3 = vector.load %arg1[%c0_3, %c0_4] : memref<1x128xi32, #tpu.memory_space<vmem>>, vector<1x128xi32>
    %c0_i32 = arith.constant 0 : i32
    %c31_i32 = arith.constant 31 : i32
    %4 = vector.broadcast %c0_i32 : i32 to vector<1x128xi32>
    %5 = arith.maxsi %4, %3 : vector<1x128xi32>
    %6 = vector.broadcast %c31_i32 : i32 to vector<1x128xi32>
    %7 = arith.minsi %6, %5 : vector<1x128xi32>
    %c0_5 = arith.constant 0 : index
    %c0_6 = arith.constant 0 : index
    %8 = vector.load %arg2[%c0_5, %c0_6] : memref<1x128xi32, #tpu.memory_space<vmem>>, vector<1x128xi32>
    %c0_i32_7 = arith.constant 0 : i32
    %c47_i32 = arith.constant 47 : i32
    %9 = vector.broadcast %c0_i32_7 : i32 to vector<1x128xi32>
    %10 = arith.maxsi %9, %8 : vector<1x128xi32>
    %11 = vector.broadcast %c47_i32 : i32 to vector<1x128xi32>
    %12 = arith.minsi %11, %10 : vector<1x128xi32>
    %c0_8 = arith.constant 0 : index
    %c0_9 = arith.constant 0 : index
    %13 = vector.load %arg3[%c0_8, %c0_9] : memref<32x128xi32, #tpu.memory_space<vmem>>, vector<32x128xi32>
    %14 = vector.broadcast %7 : vector<1x128xi32> to vector<32x128xi32>
    %15 = arith.cmpi eq, %13, %14 : vector<32x128xi32>
    %16 = arith.extui %15 : vector<32x128xi1> to vector<32x128xi32>
    %17 = arith.sitofp %16 : vector<32x128xi32> to vector<32x128xf32>
    %c0_10 = arith.constant 0 : index
    %c0_11 = arith.constant 0 : index
    %18 = vector.load %arg4[%c0_10, %c0_11] : memref<48x128xi32, #tpu.memory_space<vmem>>, vector<48x128xi32>
    %19 = vector.broadcast %12 : vector<1x128xi32> to vector<48x128xi32>
    %20 = arith.cmpi eq, %18, %19 : vector<48x128xi32>
    %21 = arith.extui %20 : vector<48x128xi1> to vector<48x128xi32>
    %22 = arith.sitofp %21 : vector<48x128xi32> to vector<48x128xf32>
    %c0_12 = arith.constant 0 : index
    %c0_13 = arith.constant 0 : index
    %23 = vector.load %arg5[%c0_12, %c0_13] : memref<16x32xf32, #tpu.memory_space<vmem>>, vector<16x32xf32>
    %cst = arith.constant dense<0.000000e+00> : vector<16x128xf32>
    %24 = tpu.matmul %23, %17, %cst {dimension_numbers = #tpu.dot_dimension_numbers<[1], [0], [0], [1], [0, 0, 1, 1], [], []>} : vector<16x32xf32>, vector<32x128xf32>, vector<16x128xf32> -> vector<16x128xf32>
    %c0_14 = arith.constant 0 : index
    %c0_15 = arith.constant 0 : index
    %25 = vector.load %arg6[%c0_14, %c0_15] : memref<16x48xf32, #tpu.memory_space<vmem>>, vector<16x48xf32>
    %cst_16 = arith.constant dense<0.000000e+00> : vector<16x128xf32>
    %26 = tpu.matmul %25, %22, %cst_16 {dimension_numbers = #tpu.dot_dimension_numbers<[1], [0], [0], [1], [0, 0, 1, 1], [], []>} : vector<16x48xf32>, vector<48x128xf32>, vector<16x128xf32> -> vector<16x128xf32>
    %27 = arith.addf %24, %26 : vector<16x128xf32>
    %28 = vector.broadcast %0 : vector<16x1xf32> to vector<16x128xf32>
    %29 = arith.addf %27, %28 : vector<16x128xf32>
    %cst_17 = arith.constant 0.000000e+00 : f32
    %30 = vector.broadcast %cst_17 : f32 to vector<16x128xf32>
    %31 = arith.maximumf %29, %30 : vector<16x128xf32>
    %c0_18 = arith.constant 0 : index
    %c0_19 = arith.constant 0 : index
    %32 = vector.load %arg8[%c0_18, %c0_19] : memref<8x16xf32, #tpu.memory_space<vmem>>, vector<8x16xf32>
    %cst_20 = arith.constant dense<0.000000e+00> : vector<8x128xf32>
    %33 = tpu.matmul %32, %31, %cst_20 {dimension_numbers = #tpu.dot_dimension_numbers<[1], [0], [0], [1], [0, 0, 1, 1], [], []>} : vector<8x16xf32>, vector<16x128xf32>, vector<8x128xf32> -> vector<8x128xf32>
    %34 = vector.broadcast %1 : vector<8x1xf32> to vector<8x128xf32>
    %35 = arith.addf %33, %34 : vector<8x128xf32>
    %cst_21 = arith.constant 0.000000e+00 : f32
    %36 = vector.broadcast %cst_21 : f32 to vector<8x128xf32>
    %37 = arith.maximumf %35, %36 : vector<8x128xf32>
    %c0_22 = arith.constant 0 : index
    %c0_23 = arith.constant 0 : index
    %38 = vector.load %arg9[%c0_22, %c0_23] : memref<1x8xf32, #tpu.memory_space<vmem>>, vector<1x8xf32>
    %cst_24 = arith.constant dense<0.000000e+00> : vector<1x128xf32>
    %39 = tpu.matmul %38, %37, %cst_24 {dimension_numbers = #tpu.dot_dimension_numbers<[1], [0], [0], [1], [0, 0, 1, 1], [], []>} : vector<1x8xf32>, vector<8x128xf32>, vector<1x128xf32> -> vector<1x128xf32>
    %40 = vector.broadcast %2 : vector<1x1xf32> to vector<1x128xf32>
    %41 = arith.addf %39, %40 : vector<1x128xf32>
    %c0_25 = arith.constant 0 : index
    %c0_26 = arith.constant 0 : index
    %42 = vector.load %arg10[%c0_25, %c0_26] : memref<1x128xf32, #tpu.memory_space<vmem>>, vector<1x128xf32>
    tpu.vector_store %arg10[%c0_25, %c0_26], %41 {strides = array<i32>} : memref<1x128xf32, #tpu.memory_space<vmem>>, vector<1x128xf32>,
    return
  }
  func.func @transform_0(%arg0: i32) -> (i32, i32) {
    %c0_i32 = arith.constant 0 : i32
    %c0_i32_0 = arith.constant 0 : i32
    return %c0_i32, %arg0 : i32, i32
  }
  func.func @transform_1(%arg0: i32) -> (i32, i32) {
    %c0_i32 = arith.constant 0 : i32
    %c0_i32_0 = arith.constant 0 : i32
    return %c0_i32, %arg0 : i32, i32
  }
  func.func @transform_2(%arg0: i32) -> (i32, i32) {
    %c0_i32 = arith.constant 0 : i32
    %c0_i32_0 = arith.constant 0 : i32
    %c0_i32_1 = arith.constant 0 : i32
    return %c0_i32, %c0_i32_0 : i32, i32
  }
  func.func @transform_3(%arg0: i32) -> (i32, i32) {
    %c0_i32 = arith.constant 0 : i32
    %c0_i32_0 = arith.constant 0 : i32
    %c0_i32_1 = arith.constant 0 : i32
    return %c0_i32, %c0_i32_0 : i32, i32
  }
  func.func @transform_4(%arg0: i32) -> (i32, i32) {
    %c0_i32 = arith.constant 0 : i32
    %c0_i32_0 = arith.constant 0 : i32
    %c0_i32_1 = arith.constant 0 : i32
    return %c0_i32, %c0_i32_0 : i32, i32
  }
  func.func @transform_5(%arg0: i32) -> (i32, i32) {
    %c0_i32 = arith.constant 0 : i32
    %c0_i32_0 = arith.constant 0 : i32
    %c0_i32_1 = arith.constant 0 : i32
    return %c0_i32, %c0_i32_0 : i32, i32
  }
  func.func @transform_6(%arg0: i32) -> (i32, i32) {
    %c0_i32 = arith.constant 0 : i32
    %c0_i32_0 = arith.constant 0 : i32
    %c0_i32_1 = arith.constant 0 : i32
    return %c0_i32, %c0_i32_0 : i32, i32
  }
  func.func @transform_7(%arg0: i32) -> (i32, i32) {
    %c0_i32 = arith.constant 0 : i32
    %c0_i32_0 = arith.constant 0 : i32
    %c0_i32_1 = arith.constant 0 : i32
    return %c0_i32, %c0_i32_0 : i32, i32
  }
  func.func @transform_8(%arg0: i32) -> (i32, i32) {
    %c0_i32 = arith.constant 0 : i32
    %c0_i32_0 = arith.constant 0 : i32
    %c0_i32_1 = arith.constant 0 : i32
    return %c0_i32, %c0_i32_0 : i32, i32
  }
  func.func @transform_9(%arg0: i32) -> (i32, i32) {
    %c0_i32 = arith.constant 0 : i32
    %c0_i32_0 = arith.constant 0 : i32
    return %c0_i32, %arg0 : i32, i32
  }
}

</mosaic_0001>

<llo_original>
// kernel: tpu_custom_call.1
$region0: #{tpu_custom_call.1}
  #allocation0 [shape = 'u32[]', space=smem, size = 0x4, offset = 0x4, fixed_abs, tag = 'smem constant byte address 0x4 - core index']
  #allocation1 [shape = 'u32[72,128]{1,0:T(1,128)}', space=vmem, size = 0x9000, scoped, tag = 'internal scratch']
  %s0 = inlined_call_operand.vmem [shape: s32[1,200], index: 0, kind: input, shape index: {}]
  %s1 = inlined_call_operand.hbm [shape: s32[1,200], index: 1, kind: input, shape index: {}]
  %s2 = inlined_call_operand.vmem [shape: s32[32,128], index: 2, kind: input, shape index: {}]
  %s3 = inlined_call_operand.hbm [shape: s32[48,128], index: 3, kind: input, shape index: {}]
  %s4 = inlined_call_operand.hbm [shape: f32[16,32], index: 4, kind: input, shape index: {}]
  %s5 = inlined_call_operand.hbm [shape: f32[16,48], index: 5, kind: input, shape index: {}]
  %s6 = inlined_call_operand.vmem [shape: f32[32,1], index: 6, kind: input, shape index: {}]
  %s7 = inlined_call_operand.hbm [shape: f32[8,16], index: 7, kind: input, shape index: {}]
  %s8 = inlined_call_operand.vmem [shape: f32[1,8], index: 8, kind: input, shape index: {}]
  %s9 = inlined_call_operand.hbm [shape: f32[1,200], index: 9, kind: output, shape index: {}]
  %s10 = sld [smem:[#allocation0]]
  $region89: #{tpu_custom_call.1} parent=0
    _
  %s12 = ssub.s32 1, %s10
  %s13 = scalar_select 0, %s12, %s10
  $region1: #{tpu_custom_call.1} parent=0
    #allocation2 [shape = 'u8[1024]{0}', space=vmem, size = 0x400, scoped, tag = 'input window, operand 1']
    #allocation3 [shape = 's32[2]{0}', space=sflag, size = 0x8, scoped, tag = 'scoped memory for tpu_custom_call.1']
    #allocation4 [shape = 's32[2]{0}', space=sflag, size = 0x8, scoped, tag = 'scoped memory for tpu_custom_call.1']
    #allocation5 [shape = 'u8[24576]{0}', space=vmem, size = 0x6000, scoped, tag = 'input window, operand 3, single buffered']
    #allocation6 [shape = 's32[1]{0}', space=sflag, size = 0x4, scoped, tag = 'scoped memory for tpu_custom_call.1']
    #allocation7 [shape = 'u8[8192]{0}', space=vmem, size = 0x2000, scoped, tag = 'input window, operand 4, single buffered']
    #allocation8 [shape = 'u8[8192]{0}', space=vmem, size = 0x2000, scoped, tag = 'input window, operand 5, single buffered']
    #allocation9 [shape = 's32[1]{0}', space=sflag, size = 0x4, scoped, tag = 'scoped memory for tpu_custom_call.1']
    #allocation10 [shape = 'u8[4096]{0}', space=vmem, size = 0x1000, scoped, tag = 'input window, operand 7, single buffered']
    #allocation11 [shape = 'u8[1024]{0}', space=vmem, size = 0x400, scoped, tag = 'output window, operand 0']
    %14 = vsyncpa [#allocation3], 0
    %s15 = scalar_lea.sflag [#allocation3], 1
    %16 = vsyncpa %s15, 0
    %17 = vsyncpa [#allocation6], 0
    %18 = vsyncpa [#allocation9], 0
    %19 = vsyncpa [#allocation4], 0
    %s20 = scalar_lea.sflag [#allocation4], 1
    %21 = vsyncpa %s20, 0
    loop: start=0, step=1, limit=4
    $region2: #{tpu_custom_call.1} parent=1 // loop_pre_header
      _
    $region3: #{tpu_custom_call.1} parent=1 // loop_header
      %s23 = sphi 0, %s27
      %p24 = scmp.ge.s32.totalorder %s23, 4
      %s33 = sphi 0, %s35
      %s36 = sphi 0, %s33
      %s37 = sphi 0, %s36
      %s53 = sphi 0, %s37
      %s59 = sphi 0, %s61
      %s62 = sphi 0, %s59
      %s63 = sphi 0, %s62
      %s79 = sphi 0, %s63
      %s83 = sphi 0, %s83
      %s85 = sphi 0, %s83
      %s86 = sphi 0, %s85
      %s100 = sphi 0, %s86
      %s104 = sphi 0, %s104
      %s106 = sphi 0, %s104
      %s107 = sphi 0, %s106
      %s121 = sphi 0, %s107
      %s125 = sphi 0, %s125
      %s127 = sphi 0, %s125
      %s128 = sphi 0, %s127
      %s142 = sphi 0, %s128
      %s146 = sphi 0, %s146
      %s148 = sphi 0, %s146
      %s149 = sphi 0, %s148
      %s163 = sphi 0, %s149
      %s167 = sphi 0, %s167
      %s169 = sphi 0, %s167
      %s170 = sphi 0, %s169
      %s184 = sphi 0, %s170
      %s188 = sphi 0, %s188
      %s190 = sphi 0, %s188
      %s191 = sphi 0, %s190
      %s205 = sphi 0, %s191
      %s209 = sphi 0, %s209
      %s211 = sphi 0, %s209
      %s212 = sphi 0, %s211
      %s226 = sphi 0, %s212
      %s232 = sphi 0, %s234
      %s235 = sphi 0, %s232
      %s236 = sphi 0, %s235
      %s252 = sphi 0, %s236
    $region4: #{tpu_custom_call.1} parent=1 // loop_header_branch
      %26 = sbr.rel (%p24) target = $region8
    $region5: #{tpu_custom_call.1} parent=1 // loop_body
      %s28 = ssub.s32 %s23, 1
      %s29 = ssub.s32 %s23, 2
      %s30 = sadd.s32 %s23, 1
      %s31 = ssub.s32 %s23, %s30
      %p32 = scmp.eq.s32.totalorder %s31, 0
      %s34 = sadd.s32 %s33, 1
      %s35 = scalar_select %p32, %s33, %s34
      %p38 = pneg %p32
      %p39 = scmp.eq.s32.totalorder %s23, 1
      %p40 = por %p38, %p39
      %p41 = scmp.ne.s32.totalorder %s33, %s36
      %p42 = scmp.eq.s32.totalorder %s23, 0
      %p43 = por %p41, %p42
      %p44 = scmp.ne.s32.totalorder %s33, %s36
      %p45 = scmp.eq.s32.totalorder %s28, 1
      %p46 = por %p44, %p45
      %p47 = scmp.ne.s32.totalorder %s36, %s37
      %p48 = scmp.eq.s32.totalorder %s28, 0
      %p49 = por %p47, %p48
      %p50 = scmp.ne.s32.totalorder %s36, %s37
      %p51 = scmp.eq.s32.totalorder %s29, 1
      %p52 = por %p50, %p51
      %p54 = scmp.ne.s32.totalorder %s37, %s53
      %p55 = scmp.eq.s32.totalorder %s29, 0
      %p56 = por %p54, %p55
      %s57 = ssub.s32 %s23, %s30
      %p58 = scmp.eq.s32.totalorder %s57, 0
      %s60 = sadd.s32 %s59, 1
      %s61 = scalar_select %p58, %s59, %s60
      %p64 = pneg %p58
      %p65 = scmp.eq.s32.totalorder %s23, 1
      %p66 = por %p64, %p65
      %p67 = scmp.ne.s32.totalorder %s59, %s62
      %p68 = scmp.eq.s32.totalorder %s23, 0
      %p69 = por %p67, %p68
      %p70 = scmp.ne.s32.totalorder %s59, %s62
      %p71 = scmp.eq.s32.totalorder %s28, 1
      %p72 = por %p70, %p71
      %p73 = scmp.ne.s32.totalorder %s62, %s63
      %p74 = scmp.eq.s32.totalorder %s28, 0
      %p75 = por %p73, %p74
      %p76 = scmp.ne.s32.totalorder %s62, %s63
      %p77 = scmp.eq.s32.totalorder %s29, 1
      %p78 = por %p76, %p77
      %p80 = scmp.ne.s32.totalorder %s63, %s79
      %p81 = scmp.eq.s32.totalorder %s29, 0
      %p82 = por %p80, %p81
      %s84 = sadd.s32 %s83, 1
      %p87 = scmp.eq.s32.totalorder %s23, 1
      %p88 = scmp.ne.s32.totalorder %s83, %s85
      %p89 = scmp.eq.s32.totalorder %s23, 0
      %p90 = por %p88, %p89
      %p91 = scmp.ne.s32.totalorder %s83, %s85
      %p92 = scmp.eq.s32.totalorder %s28, 1
      %p93 = por %p91, %p92
      %p94 = scmp.ne.s32.totalorder %s85, %s86
      %p95 = scmp.eq.s32.totalorder %s28, 0
      %p96 = por %p94, %p95
      %p97 = scmp.ne.s32.totalorder %s85, %s86
      %p98 = scmp.eq.s32.totalorder %s29, 1
      %p99 = por %p97, %p98
      %p101 = scmp.ne.s32.totalorder %s86, %s100
      %p102 = scmp.eq.s32.totalorder %s29, 0
      %p103 = por %p101, %p102
      %s105 = sadd.s32 %s104, 1
      %p108 = scmp.eq.s32.totalorder %s23, 1
      %p109 = scmp.ne.s32.totalorder %s104, %s106
      %p110 = scmp.eq.s32.totalorder %s23, 0
      %p111 = por %p109, %p110
      %p112 = scmp.ne.s32.totalorder %s104, %s106
      %p113 = scmp.eq.s32.totalorder %s28, 1
      %p114 = por %p112, %p113
      %p115 = scmp.ne.s32.totalorder %s106, %s107
      %p116 = scmp.eq.s32.totalorder %s28, 0
      %p117 = por %p115, %p116
      %p118 = scmp.ne.s32.totalorder %s106, %s107
      %p119 = scmp.eq.s32.totalorder %s29, 1
      %p120 = por %p118, %p119
      %p122 = scmp.ne.s32.totalorder %s107, %s121
      %p123 = scmp.eq.s32.totalorder %s29, 0
      %p124 = por %p122, %p123
      %s126 = sadd.s32 %s125, 1
      %p129 = scmp.eq.s32.totalorder %s23, 1
      %p130 = scmp.ne.s32.totalorder %s125, %s127
      %p131 = scmp.eq.s32.totalorder %s23, 0
      %p132 = por %p130, %p131
      %p133 = scmp.ne.s32.totalorder %s125, %s127
      %p134 = scmp.eq.s32.totalorder %s28, 1
      %p135 = por %p133, %p134
      %p136 = scmp.ne.s32.totalorder %s127, %s128
      %p137 = scmp.eq.s32.totalorder %s28, 0
      %p138 = por %p136, %p137
      %p139 = scmp.ne.s32.totalorder %s127, %s128
      %p140 = scmp.eq.s32.totalorder %s29, 1
      %p141 = por %p139, %p140
      %p143 = scmp.ne.s32.totalorder %s128, %s142
      %p144 = scmp.eq.s32.totalorder %s29, 0
      %p145 = por %p143, %p144
      %s147 = sadd.s32 %s146, 1
      %p150 = scmp.eq.s32.totalorder %s23, 1
      %p151 = scmp.ne.s32.totalorder %s146, %s148
      %p152 = scmp.eq.s32.totalorder %s23, 0
      %p153 = por %p151, %p152
      %p154 = scmp.ne.s32.totalorder %s146, %s148
      %p155 = scmp.eq.s32.totalorder %s28, 1
      %p156 = por %p154, %p155
      %p157 = scmp.ne.s32.totalorder %s148, %s149
      %p158 = scmp.eq.s32.totalorder %s28, 0
      %p159 = por %p157, %p158
      %p160 = scmp.ne.s32.totalorder %s148, %s149
      %p161 = scmp.eq.s32.totalorder %s29, 1
      %p162 = por %p160, %p161
      %p164 = scmp.ne.s32.totalorder %s149, %s163
      %p165 = scmp.eq.s32.totalorder %s29, 0
      %p166 = por %p164, %p165
      %s168 = sadd.s32 %s167, 1
      %p171 = scmp.eq.s32.totalorder %s23, 1
      %p172 = scmp.ne.s32.totalorder %s167, %s169
      %p173 = scmp.eq.s32.totalorder %s23, 0
      %p174 = por %p172, %p173
      %p175 = scmp.ne.s32.totalorder %s167, %s169
      %p176 = scmp.eq.s32.totalorder %s28, 1
      %p177 = por %p175, %p176
      %p178 = scmp.ne.s32.totalorder %s169, %s170
      %p179 = scmp.eq.s32.totalorder %s28, 0
      %p180 = por %p178, %p179
      %p181 = scmp.ne.s32.totalorder %s169, %s170
      %p182 = scmp.eq.s32.totalorder %s29, 1
      %p183 = por %p181, %p182
      %p185 = scmp.ne.s32.totalorder %s170, %s184
      %p186 = scmp.eq.s32.totalorder %s29, 0
      %p187 = por %p185, %p186
      %s189 = sadd.s32 %s188, 1
      %p192 = scmp.eq.s32.totalorder %s23, 1
      %p193 = scmp.ne.s32.totalorder %s188, %s190
      %p194 = scmp.eq.s32.totalorder %s23, 0
      %p195 = por %p193, %p194
      %p196 = scmp.ne.s32.totalorder %s188, %s190
      %p197 = scmp.eq.s32.totalorder %s28, 1
      %p198 = por %p196, %p197
      %p199 = scmp.ne.s32.totalorder %s190, %s191
      %p200 = scmp.eq.s32.totalorder %s28, 0
      %p201 = por %p199, %p200
      %p202 = scmp.ne.s32.totalorder %s190, %s191
      %p203 = scmp.eq.s32.totalorder %s29, 1
      %p204 = por %p202, %p203
      %p206 = scmp.ne.s32.totalorder %s191, %s205
      %p207 = scmp.eq.s32.totalorder %s29, 0
      %p208 = por %p206, %p207
      %s210 = sadd.s32 %s209, 1
      %p213 = scmp.eq.s32.totalorder %s23, 1
      %p214 = scmp.ne.s32.totalorder %s209, %s211
      %p215 = scmp.eq.s32.totalorder %s23, 0
      %p216 = por %p214, %p215
      %p217 = scmp.ne.s32.totalorder %s209, %s211
      %p218 = scmp.eq.s32.totalorder %s28, 1
      %p219 = por %p217, %p218
      %p220 = scmp.ne.s32.totalorder %s211, %s212
      %p221 = scmp.eq.s32.totalorder %s28, 0
      %p222 = por %p220, %p221
      %p223 = scmp.ne.s32.totalorder %s211, %s212
      %p224 = scmp.eq.s32.totalorder %s29, 1
      %p225 = por %p223, %p224
      %p227 = scmp.ne.s32.totalorder %s212, %s226
      %p228 = scmp.eq.s32.totalorder %s29, 0
      %p229 = por %p227, %p228
      %s230 = ssub.s32 %s23, %s30
      %p231 = scmp.eq.s32.totalorder %s230, 0
      %s233 = sadd.s32 %s232, 1
      %s234 = scalar_select %p231, %s232, %s233
      %p237 = pneg %p231
      %p238 = scmp.eq.s32.totalorder %s23, 1
      %p239 = por %p237, %p238
      %p240 = scmp.ne.s32.totalorder %s232, %s235
      %p241 = scmp.eq.s32.totalorder %s23, 0
      %p242 = por %p240, %p241
      %p243 = scmp.ne.s32.totalorder %s232, %s235
      %p244 = scmp.eq.s32.totalorder %s28, 1
      %p245 = por %p243, %p244
      %p246 = scmp.ne.s32.totalorder %s235, %s236
      %p247 = scmp.eq.s32.totalorder %s28, 0
      %p248 = por %p246, %p247
      %p249 = scmp.ne.s32.totalorder %s235, %s236
      %p250 = scmp.eq.s32.totalorder %s29, 1
      %p251 = por %p249, %p250
      %p253 = scmp.ne.s32.totalorder %s236, %s252
      %p254 = scmp.eq.s32.totalorder %s29, 0
      %p255 = por %p253, %p254
      %p256 = scmp.le.s32.totalorder 1, %s23
      %p257 = scmp.lt.s32.totalorder %s23, 3
      %p258 = pnand %p256, %p257
      %p259 = pneg %p258
      // Predicated region
      $region9: #{tpu_custom_call.1} parent=5 // pred_check
        _
      $region10: #{tpu_custom_call.1} parent=5 // pred_check_branch
        %261 = sbr.rel (%p258) target = $region12
      $region11: #{tpu_custom_call.1} parent=5 // pred_region
        %s262 = ssub.s32 %s23, 1
        // Predicated region
        $region13: #{tpu_custom_call.1} parent=11 // pred_check
          %p263 = pneg %p96
        $region14: #{tpu_custom_call.1} parent=11 // pred_check_branch
          %265 = sbr.rel (%p263) target = $region16
        $region15: #{tpu_custom_call.1} parent=11 // pred_region
          _
        $region16: #{tpu_custom_call.1} parent=11 // pred_fallthru
          _
        // Predicated region
        $region17: #{tpu_custom_call.1} parent=11 // pred_check
          %p266 = pneg %p117
        $region18: #{tpu_custom_call.1} parent=11 // pred_check_branch
          %268 = sbr.rel (%p266) target = $region20
        $region19: #{tpu_custom_call.1} parent=11 // pred_region
          %270 = vsyncadd [#allocation6], 0
          %s271 = sshll.u32 %s3, 4
          %s272 = int_to_ptr.hbm [resolvable:$true] %s271
          %s273 = sshll.u32 [#allocation5], 4
          %s274 = int_to_ptr.vmem [resolvable:$true] %s273
          %279 = dma.hbm_to_vmem [thread:$0]  %s272, 768, %s274, [#allocation6], 128, 128, 8
        $region20: #{tpu_custom_call.1} parent=11 // pred_fallthru
          _
        // Predicated region
        $region21: #{tpu_custom_call.1} parent=11 // pred_check
          %p280 = pneg %p138
        $region22: #{tpu_custom_call.1} parent=11 // pred_check_branch
          %282 = sbr.rel (%p280) target = $region24
        $region23: #{tpu_custom_call.1} parent=11 // pred_region
          %284 = vsyncadd [#allocation6], 0
          %s285 = sshll.u32 %s4, 4
          %s286 = int_to_ptr.hbm [resolvable:$true] %s285
          %s287 = sshll.u32 [#allocation7], 4
          %s288 = int_to_ptr.vmem [resolvable:$true] %s287
          %293 = dma.hbm_to_vmem [thread:$0]  %s286, 256, %s288, [#allocation6], 128, 128, 8
        $region24: #{tpu_custom_call.1} parent=11 // pred_fallthru
          _
        // Predicated region
        $region25: #{tpu_custom_call.1} parent=11 // pred_check
          %p294 = pneg %p159
        $region26: #{tpu_custom_call.1} parent=11 // pred_check_branch
          %296 = sbr.rel (%p294) target = $region28
        $region27: #{tpu_custom_call.1} parent=11 // pred_region
          %298 = vsyncadd [#allocation9], 0
          %s299 = sshll.u32 %s5, 4
          %s300 = int_to_ptr.hbm [resolvable:$true] %s299
          %s301 = sshll.u32 [#allocation8], 4
          %s302 = int_to_ptr.vmem [resolvable:$true] %s301
          %307 = dma.hbm_to_vmem [thread:$0]  %s300, 256, %s302, [#allocation9], 128, 128, 8
        $region28: #{tpu_custom_call.1} parent=11 // pred_fallthru
          _
        // Predicated region
        $region29: #{tpu_custom_call.1} parent=11 // pred_check
          %p308 = pneg %p180
        $region30: #{tpu_custom_call.1} parent=11 // pred_check_branch
          %310 = sbr.rel (%p308) target = $region32
        $region31: #{tpu_custom_call.1} parent=11 // pred_region
          _
        $region32: #{tpu_custom_call.1} parent=11 // pred_fallthru
          _
        // Predicated region
        $region33: #{tpu_custom_call.1} parent=11 // pred_check
          %p311 = pneg %p201
        $region34: #{tpu_custom_call.1} parent=11 // pred_check_branch
          %313 = sbr.rel (%p311) target = $region36
        $region35: #{tpu_custom_call.1} parent=11 // pred_region
          %315 = vsyncadd [#allocation9], 0
          %s317 = sshll.u32 %s7, 4
          %s318 = int_to_ptr.hbm [resolvable:$true] %s317
          %s319 = sshll.u32 [#allocation10], 4
          %s320 = int_to_ptr.vmem [resolvable:$true] %s319
          %322 = dma.hbm_to_vmem [thread:$0]  %s318, 128, %s320, [#allocation9]
        $region36: #{tpu_custom_call.1} parent=11 // pred_fallthru
          _
        // Predicated region
        $region37: #{tpu_custom_call.1} parent=11 // pred_check
          %p323 = pneg %p222
        $region38: #{tpu_custom_call.1} parent=11 // pred_check_branch
          %325 = sbr.rel (%p323) target = $region40
        $region39: #{tpu_custom_call.1} parent=11 // pred_region
          _
        $region40: #{tpu_custom_call.1} parent=11 // pred_fallthru
          _
      $region12: #{tpu_custom_call.1} parent=5 // pred_fallthru
        _
      %p326 = scmp.lt.s32.totalorder %s23, 2
      // Predicated region
      $region41: #{tpu_custom_call.1} parent=5 // pred_check
        %p327 = pneg %p326
      $region42: #{tpu_custom_call.1} parent=5 // pred_check_branch
        %329 = sbr.rel (%p327) target = $region44
      $region43: #{tpu_custom_call.1} parent=5 // pred_region
        // Predicated region
        $region45: #{tpu_custom_call.1} parent=43 // pred_check
          %p330 = pneg %p43
        $region46: #{tpu_custom_call.1} parent=43 // pred_check_branch
          %332 = sbr.rel (%p330) target = $region48
        $region47: #{tpu_custom_call.1} parent=43 // pred_region
          %p333 = scmp.lt.s32.totalorder %s23, 1
          %s334 = scalar_select %p333, %s23, 1
          %s335 = scalar_lea.vmem %s0, %s334
        $region48: #{tpu_custom_call.1} parent=43 // pred_fallthru
          _
        // Predicated region
        $region49: #{tpu_custom_call.1} parent=43 // pred_check
          %p336 = pneg %p69
        $region50: #{tpu_custom_call.1} parent=43 // pred_check_branch
          %338 = sbr.rel (%p336) target = $region52
        $region51: #{tpu_custom_call.1} parent=43 // pred_region
          %s339 = sand.u32 %s59, 1
          %s340 = scalar_lea.sflag [#allocation3], %s339
          %s341 = sand.u32 %s59, 1
          %s342 = scalar_lea.vmem [#allocation2], %s341
          %344 = vsyncadd %s340, 0
          %s345 = scalar_lea.hbm %s1, %s23
          %s347 = sshll.u32 %s345, 4
          %s348 = int_to_ptr.hbm [resolvable:$true] %s347
          %s349 = sshll.u32 %s342, 4
          %s350 = int_to_ptr.vmem [resolvable:$true] %s349
          %352 = dma.hbm_to_vmem [thread:$0]  %s348, 16, %s350, %s340
        $region52: #{tpu_custom_call.1} parent=43 // pred_fallthru
          _
      $region44: #{tpu_custom_call.1} parent=5 // pred_fallthru
        _
      %p353 = scmp.le.s32.totalorder 1, %s23
      %p354 = scmp.lt.s32.totalorder %s23, 3
      %p355 = pnand %p353, %p354
      %p356 = pneg %p355
      // Predicated region
      $region53: #{tpu_custom_call.1} parent=5 // pred_check
        _
      $region54: #{tpu_custom_call.1} parent=5 // pred_check_branch
        %358 = sbr.rel (%p355) target = $region56
      $region55: #{tpu_custom_call.1} parent=5 // pred_region
        %s359 = ssub.s32 %s23, 1
        %s360 = sand.u32 %s62, 1
        %s361 = scalar_lea.sflag [#allocation3], %s360
        %s362 = sand.u32 %s62, 1
        %s363 = scalar_lea.vmem [#allocation2], %s362
        // Predicated region
        $region57: #{tpu_custom_call.1} parent=55 // pred_check
          %p364 = pneg %p75
        $region58: #{tpu_custom_call.1} parent=55 // pred_check_branch
          %366 = sbr.rel (%p364) target = $region60
        $region59: #{tpu_custom_call.1} parent=55 // pred_region
          %368 = dma.done %s361, 16
        $region60: #{tpu_custom_call.1} parent=55 // pred_fallthru
          _
        // Predicated region
        $region61: #{tpu_custom_call.1} parent=55 // pred_check
          %p369 = pneg %p117
        $region62: #{tpu_custom_call.1} parent=55 // pred_check_branch
          %371 = sbr.rel (%p369) target = $region64
        $region63: #{tpu_custom_call.1} parent=55 // pred_region
          %373 = dma.done [#allocation6], 768
        $region64: #{tpu_custom_call.1} parent=55 // pred_fallthru
          _
        // Predicated region
        $region65: #{tpu_custom_call.1} parent=55 // pred_check
          %p374 = pneg %p138
        $region66: #{tpu_custom_call.1} parent=55 // pred_check_branch
          %376 = sbr.rel (%p374) target = $region68
        $region67: #{tpu_custom_call.1} parent=55 // pred_region
          %378 = dma.done [#allocation6], 256
        $region68: #{tpu_custom_call.1} parent=55 // pred_fallthru
          _
        // Predicated region
        $region69: #{tpu_custom_call.1} parent=55 // pred_check
          %p379 = pneg %p159
        $region70: #{tpu_custom_call.1} parent=55 // pred_check_branch
          %381 = sbr.rel (%p379) target = $region72
        $region71: #{tpu_custom_call.1} parent=55 // pred_region
          %383 = dma.done [#allocation9], 256
        $region72: #{tpu_custom_call.1} parent=55 // pred_fallthru
          _
        // Predicated region
        $region73: #{tpu_custom_call.1} parent=55 // pred_check
          %p384 = pneg %p201
        $region74: #{tpu_custom_call.1} parent=55 // pred_check_branch
          %386 = sbr.rel (%p384) target = $region76
        $region75: #{tpu_custom_call.1} parent=55 // pred_region
          %388 = dma.done [#allocation9], 128
        $region76: #{tpu_custom_call.1} parent=55 // pred_fallthru
          _
        %p389 = scmp.lt.s32.totalorder %s28, 1
        %s390 = scalar_select %p389, %s28, 1
        %s391 = scalar_lea.vmem %s0, %s390
        %p392 = pneg %p49
        %p393 = pneg %p46
        %s394 = sand.u32 %s62, 1
        %s395 = scalar_lea.sflag [#allocation3], %s394
        %s396 = sand.u32 %s62, 1
        %s397 = scalar_lea.vmem [#allocation2], %s396
        %p398 = pneg %p75
        %p399 = pneg %p72
        %p400 = pneg %p96
        %p401 = pneg %p93
        %p402 = pneg %p117
        %p403 = pneg %p114
        %p404 = pneg %p138
        %p405 = pneg %p135
        %p406 = pneg %p159
        %p407 = pneg %p156
        %p408 = pneg %p180
        %p409 = pneg %p177
        %p410 = pneg %p201
        %p411 = pneg %p198
        %p412 = pneg %p222
        %p413 = pneg %p219
        %p414 = pneg %p248
        %p415 = pneg %p245
        %s416 = sand.u32 %s235, 1
        %s417 = scalar_lea.sflag [#allocation4], %s416
        %s418 = sand.u32 %s235, 1
        %s419 = scalar_lea.vmem [#allocation11], %s418
        %p420 = scmp.lt.s32.totalorder %s28, 1
        %s421 = scalar_select %p420, %s28, 1
        %s422 = scalar_lea.vmem %s0, %s421
        %v423 = vld [vmem:[%s6] sm:$0xff]
        %v424 = vld [vmem:[%s6 + $0x8] sm:$0xff]
        %v425 = vld [vmem:[%s6 + $0x10] sm:$0xff]
        %v426 = vld [vmem:[%s6 + $0x18] sm:$0x1]
        %v427 = vld [vmem:[%s422] sm:$0x1]
        %vm428 = vcmp.gt.s32.totalorder %v427, 0
        %v429 = vsel %vm428, %v427, 0
        %vm430 = vcmp.lt.s32.totalorder %v429, 31
        %v431 = vsel %vm430, %v429, 31
        %v432 = vld [vmem:[%s363] sm:$0x1]
        %vm433 = vcmp.gt.s32.totalorder %v432, 0
        %v434 = vsel %vm433, %v432, 0
        %vm435 = vcmp.lt.s32.totalorder %v434, 47
        %v436 = vsel %vm435, %v434, 47
        %v437 = vld [vmem:[%s2] sm:$0xff]
        %v438 = vld [vmem:[%s2 + $0x8] sm:$0xff]
        %v439 = vld [vmem:[%s2 + $0x10] sm:$0xff]
        %v440 = vld [vmem:[%s2 + $0x18] sm:$0xff]
        %v441 = vperm.slane %v431, 0
        %vm442 = vcmp.eq.s32.totalorder %v437, %v441
        %vm443 = vcmp.eq.s32.totalorder %v438, %v441
        %vm444 = vcmp.eq.s32.totalorder %v439, %v441
        %vm445 = vcmp.eq.s32.totalorder %v440, %v441
        %v446 = vsel %vm442, 1, 0
        %v447 = vsel %vm443, 1, 0
        %v448 = vsel %vm444, 1, 0
        %v449 = vsel %vm445, 1, 0
        %v450 = vcvt.s32.f32 %v446
        %v451 = vcvt.s32.f32 %v447
        %v452 = vcvt.s32.f32 %v448
        %v453 = vcvt.s32.f32 %v449
        %v454 = vld [vmem:[#allocation5] sm:$0xff]
        %v455 = vld [vmem:[#allocation5 + $0x8] sm:$0xff]
        %v456 = vld [vmem:[#allocation5 + $0x10] sm:$0xff]
        %v457 = vld [vmem:[#allocation5 + $0x18] sm:$0xff]
        %v458 = vld [vmem:[#allocation5 + $0x20] sm:$0xff]
        %v459 = vld [vmem:[#allocation5 + $0x28] sm:$0xff]
        %v460 = vperm.slane %v436, 0
        %vm461 = vcmp.eq.s32.totalorder %v454, %v460
        %vm462 = vcmp.eq.s32.totalorder %v455, %v460
        %vm463 = vcmp.eq.s32.totalorder %v456, %v460
        %vm464 = vcmp.eq.s32.totalorder %v457, %v460
        %vm465 = vcmp.eq.s32.totalorder %v458, %v460
        %vm466 = vcmp.eq.s32.totalorder %v459, %v460
        %v467 = vsel %vm461, 1, 0
        %v468 = vsel %vm462, 1, 0
        %v469 = vsel %vm463, 1, 0
        %v470 = vsel %vm464, 1, 0
        %v471 = vsel %vm465, 1, 0
        %v472 = vsel %vm466, 1, 0
        %v473 = vcvt.s32.f32 %v467
        %v474 = vcvt.s32.f32 %v468
        %v475 = vcvt.s32.f32 %v469
        %v476 = vcvt.s32.f32 %v470
        %v477 = vcvt.s32.f32 %v471
        %v478 = vcvt.s32.f32 %v472
        %v479 = vld [vmem:[#allocation7] sm:$0xff]
        %v480 = vld [vmem:[#allocation7 + $0x8] sm:$0xff]
        %v481 = vld [vmem:[#allocation8] sm:$0xff]
        %v482 = vld [vmem:[#allocation8 + $0x8] sm:$0xff]
        %vm483 = vcmask 392192
        %v485 = vsel %vm483, %v481, 0
        %v488 = vsel %vm483, %v482, 0
        %490 = vmatpush.msra.mxu0 0.0
        %491 = vmatpush.msra.mxu0 0.0
        %492 = vmatpush.msra.mxu0 0.0
        %493 = vmatpush.msra.mxu0 0.0
        %494 = vmatpush.msra.mxu0 0.0
        %495 = vmatpush.msra.mxu0 0.0
        %496 = vmatpush.msra.mxu0 0.0
        %497 = vmatpush.msra.mxu0 0.0
        %498 = vmatpush.msra.mxu0 0.0
        %499 = vmatpush.msra.mxu0 0.0
        %500 = vmatpush.msra.mxu0 %v478
        %501 = vmatpush.msra.mxu0 %v477
        %502 = vmatpush.msra.mxu0 %v476
        %503 = vmatpush.msra.mxu0 %v475
        %504 = vmatpush.msra.mxu0 %v474
        %505 = vmatpush.msra.mxu0 %v473
        %506 = vmatmul.f32.gmra.mxu0 %v485
        %v507 = vpop.f32.mrf.mxu0
        %v508 = vadd.f32 0.0, %v507
        %509 = vmatmul.f32.gmra.mxu0 %v488
        %v510 = vpop.f32.mrf.mxu0
        %v511 = vadd.f32 0.0, %v510
        %512 = vdwg.mxu0
        %vm513 = vcmask 261120
        %v515 = vsel %vm513, %v479, 0
        %v518 = vsel %vm513, %v480, 0
        %520 = vmatpush.msra.mxu0 0.0
        %521 = vmatpush.msra.mxu0 0.0
        %522 = vmatpush.msra.mxu0 0.0
        %523 = vmatpush.msra.mxu0 0.0
        %524 = vmatpush.msra.mxu0 0.0
        %525 = vmatpush.msra.mxu0 0.0
        %526 = vmatpush.msra.mxu0 0.0
        %527 = vmatpush.msra.mxu0 0.0
        %528 = vmatpush.msra.mxu0 0.0
        %529 = vmatpush.msra.mxu0 0.0
        %530 = vmatpush.msra.mxu0 0.0
        %531 = vmatpush.msra.mxu0 0.0
        %532 = vmatpush.msra.mxu0 %v453
        %533 = vmatpush.msra.mxu0 %v452
        %534 = vmatpush.msra.mxu0 %v451
        %535 = vmatpush.msra.mxu0 %v450
        %536 = vmatmul.f32.gmra.mxu0 %v515
        %v537 = vpop.f32.mrf.mxu0
        %v538 = vadd.f32 %v508, %v537
        %539 = vmatmul.f32.gmra.mxu0 %v518
        %v540 = vpop.f32.mrf.mxu0
        %v541 = vadd.f32 %v511, %v540
        %542 = vdwg.mxu0
        %544 = vset.pattern.permute.xlu0 0
        %545 = vperm.xlu0 %544, %v423
        %v546 = vpop.permute.xlu0 %545
        %549 = vset.pattern.permute.xlu0 0
        %550 = vperm.xlu0 %549, %v424
        %v551 = vpop.permute.xlu0 %550
        %v553 = vadd.f32 %v538, %v546
        %v554 = vadd.f32 %v541, %v551
        %v555 = vmax.f32 %v553, 0.0
        %v556 = vmax.f32 %v554, 0.0
        %v557 = vld [vmem:[#allocation10] sm:$0xff]
        %559 = vset.pattern.permute.xlu0 0
        %560 = vperm.xlu0 %559, %v425
        %v561 = vpop.permute.xlu0 %560
        %vm563 = vcmask 130048
        %v565 = vsel %vm563, %v557, 0
        %567 = vmatpush.msra.mxu0 0.0
        %568 = vmatpush.msra.mxu0 0.0
        %569 = vmatpush.msra.mxu0 0.0
        %570 = vmatpush.msra.mxu0 0.0
        %571 = vmatpush.msra.mxu0 0.0
        %572 = vmatpush.msra.mxu0 0.0
        %573 = vmatpush.msra.mxu0 0.0
        %574 = vmatpush.msra.mxu0 0.0
        %575 = vmatpush.msra.mxu0 0.0
        %576 = vmatpush.msra.mxu0 0.0
        %577 = vmatpush.msra.mxu0 0.0
        %578 = vmatpush.msra.mxu0 0.0
        %579 = vmatpush.msra.mxu0 0.0
        %580 = vmatpush.msra.mxu0 0.0
        %581 = vmatpush.msra.mxu0 %v556
        %582 = vmatpush.msra.mxu0 %v555
        %583 = vmatmul.f32.gmra.mxu0 %v565
        %v584 = vpop.f32.mrf.mxu0
        %v585 = vadd.f32 %v561, %v584
        %586 = vdwg.mxu0
        %v587 = vmax.f32 %v585, 0.0
        %v588 = vld [vmem:[%s8] sm:$0x1]
        %590 = vset.pattern.permute.xlu0 0
        %591 = vperm.xlu0 %590, %v426
        %v592 = vpop.permute.xlu0 %591
        %vm594 = vcmask 64512
        %v596 = vsel %vm594, %v588, 0
        %598 = vmatpush.msra.mxu0 0.0
        %599 = vmatpush.msra.mxu0 0.0
        %600 = vmatpush.msra.mxu0 0.0
        %601 = vmatpush.msra.mxu0 0.0
        %602 = vmatpush.msra.mxu0 0.0
        %603 = vmatpush.msra.mxu0 0.0
        %604 = vmatpush.msra.mxu0 0.0
        %605 = vmatpush.msra.mxu0 0.0
        %606 = vmatpush.msra.mxu0 0.0
        %607 = vmatpush.msra.mxu0 0.0
        %608 = vmatpush.msra.mxu0 0.0
        %609 = vmatpush.msra.mxu0 0.0
        %610 = vmatpush.msra.mxu0 0.0
        %611 = vmatpush.msra.mxu0 0.0
        %612 = vmatpush.msra.mxu0 0.0
        %613 = vmatpush.msra.mxu0 %v587
        %614 = vmatmul.f32.gmra.mxu0 %v596
        %v615 = vpop.f32.mrf.mxu0
        %v616 = vadd.f32 %v592, %v615
        %617 = vdwg.mxu0
        %618 = vst [vmem:[%s419] sm:$0x1] %v616
        %s619 = sand.u32 %s235, 1
        %s620 = scalar_lea.sflag [#allocation4], %s619
        %s621 = sand.u32 %s235, 1
        %s622 = scalar_lea.vmem [#allocation11], %s621
        // Predicated region
        $region77: #{tpu_custom_call.1} parent=55 // pred_check
          %p623 = pneg %p245
        $region78: #{tpu_custom_call.1} parent=55 // pred_check_branch
          %625 = sbr.rel (%p623) target = $region80
        $region79: #{tpu_custom_call.1} parent=55 // pred_region
          %627 = vsyncadd %s620, 0
          %s628 = scalar_lea.hbm %s9, %s28
          %s630 = sshll.u32 %s622, 4
          %s631 = int_to_ptr.vmem [resolvable:$true] %s630
          %s632 = sshll.u32 %s628, 4
          %s633 = int_to_ptr.hbm [resolvable:$true] %s632
          %635 = dma.vmem_to_hbm [thread:$0]  %s631, 16, %s633, %s620
        $region80: #{tpu_custom_call.1} parent=55 // pred_fallthru
          _
      $region56: #{tpu_custom_call.1} parent=5 // pred_fallthru
        _
      %p636 = scmp.le.s32.totalorder 2, %s23
      // Predicated region
      $region81: #{tpu_custom_call.1} parent=5 // pred_check
        %p637 = pneg %p636
      $region82: #{tpu_custom_call.1} parent=5 // pred_check_branch
        %639 = sbr.rel (%p637) target = $region84
      $region83: #{tpu_custom_call.1} parent=5 // pred_region
        %s640 = ssub.s32 %s23, 2
        // Predicated region
        $region85: #{tpu_custom_call.1} parent=83 // pred_check
          %p641 = pneg %p251
        $region86: #{tpu_custom_call.1} parent=83 // pred_check_branch
          %643 = sbr.rel (%p641) target = $region88
        $region87: #{tpu_custom_call.1} parent=83 // pred_region
          %s644 = sand.u32 %s236, 1
          %s645 = scalar_lea.sflag [#allocation4], %s644
          %s646 = sand.u32 %s236, 1
          %s647 = scalar_lea.vmem [#allocation11], %s646
          %649 = dma.done %s645, 16
        $region88: #{tpu_custom_call.1} parent=83 // pred_fallthru
          _
      $region84: #{tpu_custom_call.1} parent=5 // pred_fallthru
        _
    $region6: #{tpu_custom_call.1} parent=1 // loop_footer
      %s27 = sadd.s32 1, %s23
    $region7: #{tpu_custom_call.1} parent=1 // loop_footer_branch
      %22 = sbr.rel target = $region3
    $region8: #{tpu_custom_call.1} parent=1 // loop_exit
      _
    %650 = vsyncpa [#allocation3], 1
    %s651 = scalar_lea.sflag [#allocation3], 1
    %652 = vsyncpa %s651, 1
    %653 = vsyncpa [#allocation6], 1
    %654 = vsyncpa [#allocation9], 1
    %655 = vsyncpa [#allocation4], 1
    %s656 = scalar_lea.sflag [#allocation4], 1
    %657 = vsyncpa %s656, 1

</llo_original>
